<compile_context>
chip_gen: v7x
topology: tpu7x:2x2x1
jax: 0.10.0
libtpu: 0.0.40
codegen_flags: <defaults>
</compile_context>

<pallas_src>
import jax
import jax.numpy as jnp
from jax.experimental import pallas as pl
from jax.experimental.pallas import tpu as pltpu


def _pixel_norm_kernel(x_ref, o_ref):
    # x_ref / o_ref: (TILE_B, C, T) block in VMEM.
    x = x_ref[...]
    xf = x.astype(jnp.float32)
    # Per-pixel mean of squares over the channel (sublane) axis -> XLU reduce.
    ms = jnp.mean(xf * xf, axis=1, keepdims=True)            # (TILE_B, 1, T) f32
    inv = jax.lax.rsqrt(ms + 1e-8)                            # EUP rsqrt, f32
    o_ref[...] = (xf * inv).astype(o_ref.dtype)               # cast on store


def _choose_tiles(B, C, HW, elem_bytes, *, lane_tile_max=2048,
                  block_budget_bytes=2 << 20):
    """Pick (TILE_B, T): lane tile T (multiple of 128 when possible) and a
    batch tile, keeping one block within the VMEM budget."""
    LANE = 128
    if HW <= LANE:
        # Tiny spatial slab: take the full (ragged) lane extent — allowed since
        # the block dim equals the full array dim.
        T = HW
    else:
        # Max number of 128-lane chunks allowed by the per-row VMEM budget.
        budget_chunks = max(1, block_budget_bytes // (C * LANE * elem_bytes))
        max_chunks = max(1, min(HW // LANE, lane_tile_max // LANE, budget_chunks))
        if HW % LANE == 0:
            # Prefer a divisor of HW/128 so every block is full (unmasked vst).
            k = HW // LANE
            d = 1
            for cand in range(max_chunks, 0, -1):
                if k % cand == 0:
                    d = cand
                    break
            T = d * LANE
        else:
            # Ragged tail: keep blocks lane-dense (multiple of 128); only the
            # final block per row is a masked partial store.
            T = max_chunks * LANE

    # Batch tile: largest divisor of B that keeps the block within budget
    # (amortizes per-step overhead for small slabs).
    tile_b = 1
    for cand in range(B, 0, -1):
        if B % cand == 0 and cand * C * T * elem_bytes <= block_budget_bytes:
            tile_b = cand
            break
    return tile_b, T


def pixel_norm(x):
    """x: (B, C, H, W) array (NCHW, matching the PyTorch module)."""
    B, C, H, W = x.shape
    HW = H * W
    x2d = x.reshape(B, C, HW)

    elem_bytes = jnp.dtype(x.dtype).itemsize
    tile_b, T = _choose_tiles(B, C, HW, elem_bytes)
    grid = (B // tile_b, pl.cdiv(HW, T))

    # Double-buffered input + output blocks, plus headroom.
    block_bytes = tile_b * C * T * elem_bytes
    vmem_limit = int(min(64 << 20, max(16 << 20, 4 * block_bytes + (2 << 20))))

    out = pl.pallas_call(
        _pixel_norm_kernel,
        out_shape=jax.ShapeDtypeStruct((B, C, HW), x.dtype),
        grid_spec=pltpu.PrefetchScalarGridSpec(
            num_scalar_prefetch=0,
            grid=grid,
            in_specs=[pl.BlockSpec((tile_b, C, T), lambda b, t: (b, 0, t))],
            out_specs=pl.BlockSpec((tile_b, C, T), lambda b, t: (b, 0, t)),
        ),
        compiler_params=pltpu.CompilerParams(
            dimension_semantics=("parallel", "parallel"),
            vmem_limit_bytes=vmem_limit,
        ),
    )(x2d)

    return out.reshape(B, C, H, W)


def _reference(x):
    return x / jnp.sqrt(jnp.mean(x ** 2, axis=1, keepdims=True) + 1e-8)


if __name__ == "__main__":
    key = jax.random.PRNGKey(0)

    # Small shape consistent with the module (NCHW), spatial a multiple of 128.
    x = jax.random.normal(key, (2, 4, 16, 16), dtype=jnp.float32)
    y = jax.block_until_ready(pixel_norm(x))
    assert y.shape == x.shape and y.dtype == x.dtype
    assert jnp.max(jnp.abs(y - _reference(x))) < 1e-5

    # Ragged spatial size (HW = 144, not a multiple of 128) exercises the
    # masked edge-block path (no host-side pad/slice).
    x2 = jax.random.normal(jax.random.PRNGKey(0), (2, 4, 12, 12), dtype=jnp.float32)
    y2 = jax.block_until_ready(pixel_norm(x2))
    assert y2.shape == x2.shape and y2.dtype == x2.dtype
    assert jnp.max(jnp.abs(y2 - _reference(x2))) < 1e-5

    print("KERNEL_OK")
</pallas_src>

<mosaic_0001>
module attributes {stable_mosaic.version = 11 : i64} {
  func.func @_pixel_norm_kernel(%arg0: i32, %arg1: i32, %arg2: memref<2x4x256xf32, #tpu.memory_space<vmem>>, %arg3: memref<2x4x256xf32, #tpu.memory_space<vmem>>) attributes {dimension_semantics = [#tpu.dimension_semantics<parallel>, #tpu.dimension_semantics<parallel>], iteration_bounds = array<i64: 1, 1>, scalar_prefetch = 0 : i64, scratch_operands = 0 : i64, tpu.core_type = #tpu.core_type<tc>, window_params = [{transform_indices = @transform_0, window_bounds = array<i64: 2, 4, 256>}, {transform_indices = @transform_1, window_bounds = array<i64: 2, 4, 256>}]} {
    %c0 = arith.constant 0 : index
    %c0_0 = arith.constant 0 : index
    %c0_1 = arith.constant 0 : index
    %0 = vector.load %arg2[%c0, %c0_0, %c0_1] : memref<2x4x256xf32, #tpu.memory_space<vmem>>, vector<2x4x256xf32>
    %1 = arith.mulf %0, %0 : vector<2x4x256xf32>
    %cst = arith.constant dense<0.000000e+00> : vector<2x256xf32>
    %2 = vector.multi_reduction <add>, %1, %cst [1] : vector<2x4x256xf32> to vector<2x256xf32>
    %3 = vector.shape_cast %2 : vector<2x256xf32> to vector<2x1x256xf32>
    %cst_2 = arith.constant 4.000000e+00 : f32
    %4 = vector.broadcast %cst_2 : f32 to vector<2x1x256xf32>
    %5 = arith.divf %3, %4 : vector<2x1x256xf32>
    %cst_3 = arith.constant 9.99999993E-9 : f32
    %6 = vector.broadcast %cst_3 : f32 to vector<2x1x256xf32>
    %7 = arith.addf %5, %6 : vector<2x1x256xf32>
    %8 = math.rsqrt %7 : vector<2x1x256xf32>
    %9 = vector.broadcast %8 : vector<2x1x256xf32> to vector<2x4x256xf32>
    %10 = arith.mulf %0, %9 : vector<2x4x256xf32>
    %c0_4 = arith.constant 0 : index
    %c0_5 = arith.constant 0 : index
    %c0_6 = arith.constant 0 : index
    %11 = vector.load %arg3[%c0_4, %c0_5, %c0_6] : memref<2x4x256xf32, #tpu.memory_space<vmem>>, vector<2x4x256xf32>
    tpu.vector_store %arg3[%c0_4, %c0_5, %c0_6], %10 {strides = array<i32>} : memref<2x4x256xf32, #tpu.memory_space<vmem>>, vector<2x4x256xf32>,
    return
  }
  func.func @transform_0(%arg0: i32, %arg1: i32) -> (i32, i32, i32) {
    %c0_i32 = arith.constant 0 : i32
    %c0_i32_0 = arith.constant 0 : i32
    return %arg0, %c0_i32, %arg1 : i32, i32, i32
  }
  func.func @transform_1(%arg0: i32, %arg1: i32) -> (i32, i32, i32) {
    %c0_i32 = arith.constant 0 : i32
    %c0_i32_0 = arith.constant 0 : i32
    return %arg0, %c0_i32, %arg1 : i32, i32, i32
  }
}

</mosaic_0001>

<llo_original>
// kernel: tpu_custom_call.1
$region0: #{tpu_custom_call.1}
  #allocation0 [shape = 'u32[]', space=smem, size = 0x4, offset = 0x4, fixed_abs, tag = 'smem constant byte address 0x4 - core index']
  #allocation1 [shape = 'u32[144,128]{1,0:T(1,128)}', space=vmem, size = 0x12000, scoped, tag = 'internal scratch']
  %s0 = inlined_call_operand.hbm [shape: f32[2,4,256], index: 0, kind: input, shape index: {}]
  %s1 = inlined_call_operand.hbm [shape: f32[2,4,256], index: 1, kind: output, shape index: {}]
  %s2 = sld [smem:[#allocation0]]
  $region18: #{tpu_custom_call.1} parent=0
    _
  %s4 = ssub.s32 1, %s2
  %s5 = scalar_select 0, %s4, %s2
  $region1: #{tpu_custom_call.1} parent=0
    #allocation2 [shape = 'u8[8192]{0}', space=vmem, size = 0x2000, scoped, tag = 'input window, operand 0, single buffered']
    #allocation3 [shape = 's32[1]{0}', space=sflag, size = 0x4, scoped, tag = 'scoped memory for tpu_custom_call.1']
    #allocation4 [shape = 's32[1]{0}', space=sflag, size = 0x4, scoped, tag = 'scoped memory for tpu_custom_call.1']
    #allocation5 [shape = 'u8[8192]{0}', space=vmem, size = 0x2000, scoped, tag = 'output window, operand 0, single buffered']
    %6 = vsyncpa [#allocation3], 0
    %7 = vsyncpa [#allocation4], 0
    // Predicated region
    $region2: #{tpu_custom_call.1} parent=1 // pred_check
      _
    $region3: #{tpu_custom_call.1} parent=1 // pred_check_branch
      %9 = sbr.rel (0) target = $region5
    $region4: #{tpu_custom_call.1} parent=1 // pred_region
      %s11 = ssub.s32 256, 256
      %12 = vsyncadd [#allocation3], %s11
      %s13 = sshll.u32 [#allocation2], 4
      %s14 = int_to_ptr.vmem [resolvable:$true] %s13
      %19 = dma.hbm_to_vmem [thread:$0]  %s0, 256, %s14, [#allocation3], 128, 128, 8
    $region5: #{tpu_custom_call.1} parent=1 // pred_fallthru
      _
    // Predicated region
    $region6: #{tpu_custom_call.1} parent=1 // pred_check
      _
    $region7: #{tpu_custom_call.1} parent=1 // pred_check_branch
      %21 = sbr.rel (0) target = $region9
    $region8: #{tpu_custom_call.1} parent=1 // pred_region
      %22 = dma.done [#allocation3], 256
    $region9: #{tpu_custom_call.1} parent=1 // pred_fallthru
      _
    %v23 = vld [vmem:[#allocation2] sm:$0xff]
    %v24 = vld [vmem:[#allocation2 + $0x8] sm:$0xff]
    %v25 = vmul.f32 %v23, %v23
    %v26 = vmul.f32 %v24, %v24
    %v29 = vcombine.high %v25, %v25
    %v30 = vcombine.high %v26, %v26
    %vm33 = vcmask 1043456
    %v34 = vsel %vm33, %v25, 0.0
    %v35 = vrot.slane %v34, 4
    %v36 = vadd.f32 %v34, %v35
    %v37 = vrot.slane %v36, 2
    %v38 = vadd.f32 %v36, %v37
    %v39 = vrot.slane %v38, 1
    %v40 = vadd.f32 %v38, %v39
    %v41 = vsel %vm33, %v29, 0.0
    %v42 = vrot.slane %v41, 4
    %v43 = vadd.f32 %v41, %v42
    %v44 = vrot.slane %v43, 2
    %v45 = vadd.f32 %v43, %v44
    %v46 = vrot.slane %v45, 1
    %v47 = vadd.f32 %v45, %v46
    %v48 = vsel %vm33, %v26, 0.0
    %v49 = vrot.slane %v48, 4
    %v50 = vadd.f32 %v48, %v49
    %v51 = vrot.slane %v50, 2
    %v52 = vadd.f32 %v50, %v51
    %v53 = vrot.slane %v52, 1
    %v54 = vadd.f32 %v52, %v53
    %v55 = vsel %vm33, %v30, 0.0
    %v56 = vrot.slane %v55, 4
    %v57 = vadd.f32 %v55, %v56
    %v58 = vrot.slane %v57, 2
    %v59 = vadd.f32 %v57, %v58
    %v60 = vrot.slane %v59, 1
    %v61 = vadd.f32 %v59, %v60
    %v62 = vrcp.pop 4.0
    %v63 = vmul.f32 %v40, %v62
    %v64 = vmul.f32 %v47, %v62
    %v65 = vmul.f32 %v54, %v62
    %v66 = vmul.f32 %v61, %v62
    %v67 = vadd.f32 %v63, 1e-08
    %v68 = vadd.f32 %v64, 1e-08
    %v69 = vadd.f32 %v65, 1e-08
    %v70 = vadd.f32 %v66, 1e-08
    %v71 = vrsqrt.pop %v67
    %v72 = vrsqrt.pop %v68
    %v73 = vrsqrt.pop %v69
    %v74 = vrsqrt.pop %v70
    %v79 = vcombine.low %v71, %v72
    %v80 = vcombine.low %v73, %v74
    %v83 = vmul.f32 %v23, %v79
    %v84 = vmul.f32 %v24, %v80
    %85 = vst [vmem:[#allocation5] sm:$0xff] %v83
    %86 = vst [vmem:[#allocation5 + $0x8] sm:$0xff] %v84
    // Predicated region
    $region10: #{tpu_custom_call.1} parent=1 // pred_check
      _
    $region11: #{tpu_custom_call.1} parent=1 // pred_check_branch
      %88 = sbr.rel (0) target = $region13
    $region12: #{tpu_custom_call.1} parent=1 // pred_region
      %s90 = ssub.s32 256, 256
      %91 = vsyncadd [#allocation4], %s90
      %s92 = sshll.u32 [#allocation5], 4
      %s93 = int_to_ptr.vmem [resolvable:$true] %s92
      %98 = dma.vmem_to_hbm [thread:$0]  %s93, 256, %s1, [#allocation4], 128, 128, 8
    $region13: #{tpu_custom_call.1} parent=1 // pred_fallthru
      _
    // Predicated region
    $region14: #{tpu_custom_call.1} parent=1 // pred_check
      _
    $region15: #{tpu_custom_call.1} parent=1 // pred_check_branch
      %100 = sbr.rel (0) target = $region17
    $region16: #{tpu_custom_call.1} parent=1 // pred_region
      %101 = dma.done [#allocation4], 256
    $region17: #{tpu_custom_call.1} parent=1 // pred_fallthru
      _
    %102 = vsyncpa [#allocation3], 1
    %103 = vsyncpa [#allocation4], 1

</llo_original>
